<compile_context>
chip_gen: v7x
topology: tpu7x:2x2x1
jax: 0.10.0
libtpu: 0.0.40
codegen_flags: <defaults>
</compile_context>

<pallas_src>
import functools

import jax
import jax.numpy as jnp
from jax.experimental import pallas as pl
from jax.experimental.pallas import tpu as pltpu

LANE = 128
SUBLANE = 8


def _round_up(x, m):
    return ((x + m - 1) // m) * m


def _choose_batch_tiling(B, batch_tile):
    """Pick (TB, B_pad, n_steps).

    TB is a multiple of 8 (sublane), at most ~batch_tile, sized so that batch
    padding waste is minimal, and the grid has >= 2 balanced steps whenever the
    batch is big enough (lets v7x shard grid steps across both TensorCores)."""
    B8 = _round_up(max(int(B), 1), SUBLANE)
    n = max(1, -(-B8 // batch_tile))          # ceil(B8 / batch_tile)
    if n == 1 and B8 >= 2 * SUBLANE:
        n = 2                                  # one tile per v7x TensorCore
    TB = _round_up(-(-B8 // n), SUBLANE)
    return TB, n * TB, n


def _ae_kernel(n_layers, tanh_flags, out_dims, x_ref, b_ref, *refs):
    """refs = (w0, ..., w_{n-1}, out_ref).

    x_ref:  [TB, F_in]            (f32, real feature width)
    b_ref:  [n_layers, max_out]   (f32, packed biases; zero padded)
    w_i:    [in_i, out_i]         (param dtype; in_0 = real F_in, hidden widths
                                   128-padded, out_{n-1} = real out_features)
    """
    out_ref = refs[-1]
    w_refs = refs[:-1]

    h = x_ref[...].astype(jnp.float32)
    for i in range(n_layers):
        w = w_refs[i][...]
        lhs = h if h.dtype == w.dtype else h.astype(w.dtype)  # no cast on f32 path
        acc = jnp.dot(lhs, w, preferred_element_type=jnp.float32)
        acc = acc + b_ref[i:i + 1, :out_dims[i]].astype(jnp.float32)
        if tanh_flags[i]:
            acc = jnp.tanh(acc)  # f32 tanh: safe on v5e (no bf16 EUP)
        h = acc
    out_ref[...] = h.astype(out_ref.dtype)


def _const2d(i):  # weights / biases: same block every grid step -> VMEM resident
    return (0, 0)


def autoencoder_forward(x, padded_params, tanh_flags, *, batch_tile=1024):
    """x: [B, F] f32.  padded_params = (ws, biases) from pad_params()."""
    ws, biases = padded_params
    n_layers = len(ws)
    out_dims = tuple(int(w.shape[1]) for w in ws)
    f_in = int(ws[0].shape[0])
    f_out = out_dims[-1]

    B, F = x.shape
    assert F == f_in, (F, f_in)

    TB, B_pad, n_steps = _choose_batch_tiling(B, batch_tile)
    # Batch padding only (no feature padding); skipped entirely when not needed.
    x_in = x if B_pad == B else jnp.zeros((B_pad, F), x.dtype).at[:B].set(x)

    # VMEM budget from actual footprint, clamped to this chip's capacity.
    param_bytes = sum(int(w.size) * w.dtype.itemsize for w in ws)
    param_bytes += int(biases.size) * biases.dtype.itemsize
    io_bytes = 2 * TB * (F + f_out) * x.dtype.itemsize   # double-buffered x/out tiles
    act_bytes = 2 * TB * max(out_dims) * 4               # in-kernel f32 activations
    need = param_bytes + io_bytes + act_bytes
    try:
        vmem_cap = int(pltpu.get_tpu_info().vmem_capacity_bytes)
    except Exception:
        vmem_cap = 64 << 20                              # v7x per-TC floor
    vmem_limit = int(min(max(2 * need + (8 << 20), 32 << 20), (vmem_cap * 9) // 10))

    kernel = functools.partial(_ae_kernel, n_layers, tuple(tanh_flags), out_dims)

    def _call(param_pipeline_mode):
        def const_spec(shape):
            if param_pipeline_mode is None:
                return pl.BlockSpec(shape, _const2d)
            return pl.BlockSpec(shape, _const2d, pipeline_mode=param_pipeline_mode)

        in_specs = [pl.BlockSpec((TB, F), lambda i: (i, 0)),   # x: tiled over batch
                    const_spec(tuple(biases.shape))]           # packed biases
        in_specs += [const_spec(tuple(w.shape)) for w in ws]   # weights (resident)

        return pl.pallas_call(
            kernel,
            out_shape=jax.ShapeDtypeStruct((B_pad, f_out), x.dtype),
            grid=(n_steps,),
            in_specs=in_specs,
            out_specs=pl.BlockSpec((TB, f_out), lambda i: (i, 0)),
            compiler_params=pltpu.CompilerParams(
                dimension_semantics=("parallel",),
                vmem_limit_bytes=vmem_limit,
            ),
        )(x_in, biases, *ws)

    try:
        # Constant-index params don't need double buffering; halves resident bytes.
        out_pad = _call(pl.Buffered(1))
    except Exception:
        out_pad = _call(None)  # fallback if this jax build rejects Buffered(1) here

    return out_pad if B_pad == B else out_pad[:B]


def init_autoencoder_params(key, layer_sizes):
    """Matches torch.nn.Linear default init (U[-1/sqrt(in), 1/sqrt(in)]).

    Returns ([(w, b), ...], tanh_flags) for the encoder+decoder chain, with w
    stored as [in, out] (transposed vs torch's [out, in]). Tanh is applied after
    every Linear except the last of the encoder and the last of the decoder,
    exactly as in the torch AutoEncoder."""
    dims, tanh_flags = [], []
    n_enc = len(layer_sizes) - 1
    for i in range(n_enc):
        dims.append((layer_sizes[i], layer_sizes[i + 1]))
        tanh_flags.append(i < n_enc - 1)
    rev = layer_sizes[::-1]
    n_dec = len(rev) - 1
    for i in range(n_dec):
        dims.append((rev[i], rev[i + 1]))
        tanh_flags.append(i < n_dec - 1)

    params = []
    for fan_in, fan_out in dims:
        key, kw, kb = jax.random.split(key, 3)
        bound = 1.0 / jnp.sqrt(fan_in)
        w = jax.random.uniform(kw, (fan_in, fan_out), jnp.float32, -bound, bound)
        b = jax.random.uniform(kb, (fan_out,), jnp.float32, -bound, bound)
        params.append((w, b))
    return params, tanh_flags


def pad_params(params, param_dtype=jnp.float32):
    """Prepare layer weights for the kernel:
      * layer 0 keeps its real input width (matches the unpadded x tile),
      * hidden output widths are zero-padded to multiples of 128 (lane-dense MXU),
      * the final layer keeps its real output width (unpadded HBM writeback),
      * biases packed into one zero-padded [n_layers, max_out] f32 array.
    Zero padding is exact through Linear + Tanh (tanh(0) == 0)."""
    n = len(params)
    ws, out_dims = [], []
    in_dim = params[0][0].shape[0]  # real input feature width
    for i, (w, _) in enumerate(params):
        fan_in, fan_out = w.shape
        out_dim = fan_out if i == n - 1 else _round_up(fan_out, LANE)
        wp = (jnp.zeros((in_dim, out_dim), param_dtype)
              .at[:fan_in, :fan_out].set(w.astype(param_dtype)))
        ws.append(wp)
        out_dims.append(out_dim)
        in_dim = out_dim
    max_out = max(out_dims)
    biases = jnp.zeros((n, max_out), jnp.float32)
    for i, (_, b) in enumerate(params):
        biases = biases.at[i, :b.shape[0]].set(b.astype(jnp.float32))
    return ws, biases


def autoencoder_reference(x, params, tanh_flags):
    h = x
    for i, (w, b) in enumerate(params):
        h = h @ w + b
        if tanh_flags[i]:
            h = jnp.tanh(h)
    return h


if __name__ == "__main__":
    key = jax.random.PRNGKey(0)
    layer_sizes = [16, 32, 8]  # encoder 16->32->8, decoder 8->32->16
    kp, kx1, kx2 = jax.random.split(key, 3)
    params, tanh_flags = init_autoencoder_params(kp, layer_sizes)

    # --- f32 params (torch default dtype), small batch (grid=(1,)) ---
    ws32, b32 = pad_params(params, jnp.float32)
    x = jax.random.normal(kx1, (8, layer_sizes[0]), jnp.float32)
    out = jax.block_until_ready(autoencoder_forward(x, (ws32, b32), tanh_flags))
    ref = autoencoder_reference(x, params, tanh_flags)
    assert out.shape == x.shape
    assert jnp.allclose(out, ref, atol=1e-5, rtol=1e-5), "f32 mismatch vs reference"

    # --- ragged batch exercising adaptive tiling (B=300 -> TB=152, grid=(2,)) ---
    x_big = jax.random.normal(kx2, (300, layer_sizes[0]), jnp.float32)
    out_big = jax.block_until_ready(
        autoencoder_forward(x_big, (ws32, b32), tanh_flags))
    ref_big = autoencoder_reference(x_big, params, tanh_flags)
    assert out_big.shape == x_big.shape
    assert jnp.allclose(out_big, ref_big, atol=1e-5, rtol=1e-5), "tiled mismatch"

    # --- bf16 weights (native MXU dtype on v6e/v7x); f32 accumulate + f32 tanh ---
    ws16, b16 = pad_params(params, jnp.bfloat16)
    out_bf16 = jax.block_until_ready(
        autoencoder_forward(x_big, (ws16, b16), tanh_flags))
    assert float(jnp.max(jnp.abs(out_bf16 - ref_big))) < 5e-2, "bf16 path diverged"

    print("KERNEL_OK")
</pallas_src>

<mosaic_0001>
module attributes {stable_mosaic.version = 11 : i64} {
  func.func @_ae_kernel(%arg0: i32, %arg1: memref<8x16xf32, #tpu.memory_space<vmem>>, %arg2: memref<4x128xf32, #tpu.memory_space<vmem>>, %arg3: memref<16x128xf32, #tpu.memory_space<vmem>>, %arg4: memref<128x128xf32, #tpu.memory_space<vmem>>, %arg5: memref<128x128xf32, #tpu.memory_space<vmem>>, %arg6: memref<128x16xf32, #tpu.memory_space<vmem>>, %arg7: memref<8x16xf32, #tpu.memory_space<vmem>>) attributes {dimension_semantics = [#tpu.dimension_semantics<parallel>], iteration_bounds = array<i64: 1>, scalar_prefetch = 0 : i64, scratch_operands = 0 : i64, tpu.core_type = #tpu.core_type<tc>, window_params = [{transform_indices = @transform_0, window_bounds = array<i64: 8, 16>}, {pipeline_mode = #tpu.pipeline_mode<synchronous>, transform_indices = @transform_1, window_bounds = array<i64: 4, 128>}, {pipeline_mode = #tpu.pipeline_mode<synchronous>, transform_indices = @transform_2, window_bounds = array<i64: 16, 128>}, {pipeline_mode = #tpu.pipeline_mode<synchronous>, transform_indices = @transform_3, window_bounds = array<i64: 128, 128>}, {pipeline_mode = #tpu.pipeline_mode<synchronous>, transform_indices = @transform_4, window_bounds = array<i64: 128, 128>}, {pipeline_mode = #tpu.pipeline_mode<synchronous>, transform_indices = @transform_5, window_bounds = array<i64: 128, 16>}, {transform_indices = @transform_6, window_bounds = array<i64: 8, 16>}]} {
    %c0 = arith.constant 0 : index
    %c0_0 = arith.constant 0 : index
    %0 = vector.load %arg1[%c0, %c0_0] : memref<8x16xf32, #tpu.memory_space<vmem>>, vector<8x16xf32>
    %c0_1 = arith.constant 0 : index
    %c0_2 = arith.constant 0 : index
    %1 = vector.load %arg3[%c0_1, %c0_2] : memref<16x128xf32, #tpu.memory_space<vmem>>, vector<16x128xf32>
    %cst = arith.constant dense<0.000000e+00> : vector<8x128xf32>
    %2 = tpu.matmul %0, %1, %cst {dimension_numbers = #tpu.dot_dimension_numbers<[1], [0], [0], [1], [0, 0, 1, 1], [], []>} : vector<8x16xf32>, vector<16x128xf32>, vector<8x128xf32> -> vector<8x128xf32>
    %c0_3 = arith.constant 0 : index
    %c0_4 = arith.constant 0 : index
    %3 = vector.load %arg2[%c0_3, %c0_4] : memref<4x128xf32, #tpu.memory_space<vmem>>, vector<1x128xf32>
    %4 = vector.broadcast %3 : vector<1x128xf32> to vector<8x128xf32>
    %5 = arith.addf %2, %4 : vector<8x128xf32>
    %6 = math.tanh %5 : vector<8x128xf32>
    %c0_5 = arith.constant 0 : index
    %c0_6 = arith.constant 0 : index
    %7 = vector.load %arg4[%c0_5, %c0_6] : memref<128x128xf32, #tpu.memory_space<vmem>>, vector<128x128xf32>
    %cst_7 = arith.constant dense<0.000000e+00> : vector<8x128xf32>
    %8 = tpu.matmul %6, %7, %cst_7 {dimension_numbers = #tpu.dot_dimension_numbers<[1], [0], [0], [1], [0, 0, 1, 1], [], []>} : vector<8x128xf32>, vector<128x128xf32>, vector<8x128xf32> -> vector<8x128xf32>
    %c1 = arith.constant 1 : index
    %c0_8 = arith.constant 0 : index
    %9 = vector.load %arg2[%c1, %c0_8] : memref<4x128xf32, #tpu.memory_space<vmem>>, vector<1x128xf32>
    %10 = vector.broadcast %9 : vector<1x128xf32> to vector<8x128xf32>
    %11 = arith.addf %8, %10 : vector<8x128xf32>
    %c0_9 = arith.constant 0 : index
    %c0_10 = arith.constant 0 : index
    %12 = vector.load %arg5[%c0_9, %c0_10] : memref<128x128xf32, #tpu.memory_space<vmem>>, vector<128x128xf32>
    %cst_11 = arith.constant dense<0.000000e+00> : vector<8x128xf32>
    %13 = tpu.matmul %11, %12, %cst_11 {dimension_numbers = #tpu.dot_dimension_numbers<[1], [0], [0], [1], [0, 0, 1, 1], [], []>} : vector<8x128xf32>, vector<128x128xf32>, vector<8x128xf32> -> vector<8x128xf32>
    %c2 = arith.constant 2 : index
    %c0_12 = arith.constant 0 : index
    %14 = vector.load %arg2[%c2, %c0_12] : memref<4x128xf32, #tpu.memory_space<vmem>>, vector<1x128xf32>
    %15 = vector.broadcast %14 : vector<1x128xf32> to vector<8x128xf32>
    %16 = arith.addf %13, %15 : vector<8x128xf32>
    %17 = math.tanh %16 : vector<8x128xf32>
    %c0_13 = arith.constant 0 : index
    %c0_14 = arith.constant 0 : index
    %18 = vector.load %arg6[%c0_13, %c0_14] : memref<128x16xf32, #tpu.memory_space<vmem>>, vector<128x16xf32>
    %cst_15 = arith.constant dense<0.000000e+00> : vector<8x16xf32>
    %19 = tpu.matmul %17, %18, %cst_15 {dimension_numbers = #tpu.dot_dimension_numbers<[1], [0], [0], [1], [0, 0, 1, 1], [], []>} : vector<8x128xf32>, vector<128x16xf32>, vector<8x16xf32> -> vector<8x16xf32>
    %c3 = arith.constant 3 : index
    %c0_16 = arith.constant 0 : index
    %20 = vector.load %arg2[%c3, %c0_16] : memref<4x128xf32, #tpu.memory_space<vmem>>, vector<1x16xf32>
    %21 = vector.broadcast %20 : vector<1x16xf32> to vector<8x16xf32>
    %22 = arith.addf %19, %21 : vector<8x16xf32>
    %c0_17 = arith.constant 0 : index
    %c0_18 = arith.constant 0 : index
    %23 = vector.load %arg7[%c0_17, %c0_18] : memref<8x16xf32, #tpu.memory_space<vmem>>, vector<8x16xf32>
    tpu.vector_store %arg7[%c0_17, %c0_18], %22 {strides = array<i32>} : memref<8x16xf32, #tpu.memory_space<vmem>>, vector<8x16xf32>,
    return
  }
  func.func @transform_0(%arg0: i32) -> (i32, i32) {
    %c0_i32 = arith.constant 0 : i32
    %c0_i32_0 = arith.constant 0 : i32
    return %arg0, %c0_i32 : i32, i32
  }
  func.func @transform_1(%arg0: i32) -> (i32, i32) {
    %c0_i32 = arith.constant 0 : i32
    %c0_i32_0 = arith.constant 0 : i32
    %c0_i32_1 = arith.constant 0 : i32
    return %c0_i32, %c0_i32_0 : i32, i32
  }
  func.func @transform_2(%arg0: i32) -> (i32, i32) {
    %c0_i32 = arith.constant 0 : i32
    %c0_i32_0 = arith.constant 0 : i32
    %c0_i32_1 = arith.constant 0 : i32
    return %c0_i32, %c0_i32_0 : i32, i32
  }
  func.func @transform_3(%arg0: i32) -> (i32, i32) {
    %c0_i32 = arith.constant 0 : i32
    %c0_i32_0 = arith.constant 0 : i32
    %c0_i32_1 = arith.constant 0 : i32
    return %c0_i32, %c0_i32_0 : i32, i32
  }
  func.func @transform_4(%arg0: i32) -> (i32, i32) {
    %c0_i32 = arith.constant 0 : i32
    %c0_i32_0 = arith.constant 0 : i32
    %c0_i32_1 = arith.constant 0 : i32
    return %c0_i32, %c0_i32_0 : i32, i32
  }
  func.func @transform_5(%arg0: i32) -> (i32, i32) {
    %c0_i32 = arith.constant 0 : i32
    %c0_i32_0 = arith.constant 0 : i32
    %c0_i32_1 = arith.constant 0 : i32
    return %c0_i32, %c0_i32_0 : i32, i32
  }
  func.func @transform_6(%arg0: i32) -> (i32, i32) {
    %c0_i32 = arith.constant 0 : i32
    %c0_i32_0 = arith.constant 0 : i32
    return %arg0, %c0_i32 : i32, i32
  }
}

module attributes {stable_mosaic.version = 11 : i64} {
  func.func @_ae_kernel(%arg0: i32, %arg1: memref<8x16xf32, #tpu.memory_space<vmem>>, %arg2: memref<4x128xf32, #tpu.memory_space<vmem>>, %arg3: memref<16x128xf32, #tpu.memory_space<vmem>>, %arg4: memref<128x128xf32, #tpu.memory_space<vmem>>, %arg5: memref<128x128xf32, #tpu.memory_space<vmem>>, %arg6: memref<128x16xf32, #tpu.memory_space<vmem>>, %arg7: memref<8x16xf32, #tpu.memory_space<vmem>>) attributes {dimension_semantics = [#tpu.dimension_semantics<parallel>], iteration_bounds = array<i64: 1>, scalar_prefetch = 0 : i64, scratch_operands = 0 : i64, tpu.core_type = #tpu.core_type<tc>, window_params = [{transform_indices = @transform_0, window_bounds = array<i64: 8, 16>}, {pipeline_mode = #tpu.pipeline_mode<synchronous>, transform_indices = @transform_1, window_bounds = array<i64: 4, 128>}, {pipeline_mode = #tpu.pipeline_mode<synchronous>, transform_indices = @transform_2, window_bounds = array<i64: 16, 128>}, {pipeline_mode = #tpu.pipeline_mode<synchronous>, transform_indices = @transform_3, window_bounds = array<i64: 128, 128>}, {pipeline_mode = #tpu.pipeline_mode<synchronous>, transform_indices = @transform_4, window_bounds = array<i64: 128, 128>}, {pipeline_mode = #tpu.pipeline_mode<synchronous>, transform_indices = @transform_5, window_bounds = array<i64: 128, 16>}, {transform_indices = @transform_6, window_bounds = array<i64: 8, 16>}]} {
    %c0 = arith.constant 0 : index
    %c0_0 = arith.constant 0 : index
    %0 = vector.load %arg1[%c0, %c0_0] : memref<8x16xf32, #tpu.memory_space<vmem>>, vector<8x16xf32>
    %c0_1 = arith.constant 0 : index
    %c0_2 = arith.constant 0 : index
    %1 = vector.load %arg3[%c0_1, %c0_2] : memref<16x128xf32, #tpu.memory_space<vmem>>, vector<16x128xf32>
    %cst = arith.constant dense<0.000000e+00> : vector<8x128xf32>
    %2 = tpu.matmul %0, %1, %cst {dimension_numbers = #tpu.dot_dimension_numbers<[1], [0], [0], [1], [0, 0, 1, 1], [], []>} : vector<8x16xf32>, vector<16x128xf32>, vector<8x128xf32> -> vector<8x128xf32>
    %c0_3 = arith.constant 0 : index
    %c0_4 = arith.constant 0 : index
    %3 = vector.load %arg2[%c0_3, %c0_4] : memref<4x128xf32, #tpu.memory_space<vmem>>, vector<1x128xf32>
    %4 = vector.broadcast %3 : vector<1x128xf32> to vector<8x128xf32>
    %5 = arith.addf %2, %4 : vector<8x128xf32>
    %6 = math.tanh %5 : vector<8x128xf32>
    %c0_5 = arith.constant 0 : index
    %c0_6 = arith.constant 0 : index
    %7 = vector.load %arg4[%c0_5, %c0_6] : memref<128x128xf32, #tpu.memory_space<vmem>>, vector<128x128xf32>
    %cst_7 = arith.constant dense<0.000000e+00> : vector<8x128xf32>
    %8 = tpu.matmul %6, %7, %cst_7 {dimension_numbers = #tpu.dot_dimension_numbers<[1], [0], [0], [1], [0, 0, 1, 1], [], []>} : vector<8x128xf32>, vector<128x128xf32>, vector<8x128xf32> -> vector<8x128xf32>
    %c1 = arith.constant 1 : index
    %c0_8 = arith.constant 0 : index
    %9 = vector.load %arg2[%c1, %c0_8] : memref<4x128xf32, #tpu.memory_space<vmem>>, vector<1x128xf32>
    %10 = vector.broadcast %9 : vector<1x128xf32> to vector<8x128xf32>
    %11 = arith.addf %8, %10 : vector<8x128xf32>
    %c0_9 = arith.constant 0 : index
    %c0_10 = arith.constant 0 : index
    %12 = vector.load %arg5[%c0_9, %c0_10] : memref<128x128xf32, #tpu.memory_space<vmem>>, vector<128x128xf32>
    %cst_11 = arith.constant dense<0.000000e+00> : vector<8x128xf32>
    %13 = tpu.matmul %11, %12, %cst_11 {dimension_numbers = #tpu.dot_dimension_numbers<[1], [0], [0], [1], [0, 0, 1, 1], [], []>} : vector<8x128xf32>, vector<128x128xf32>, vector<8x128xf32> -> vector<8x128xf32>
    %c2 = arith.constant 2 : index
    %c0_12 = arith.constant 0 : index
    %14 = vector.load %arg2[%c2, %c0_12] : memref<4x128xf32, #tpu.memory_space<vmem>>, vector<1x128xf32>
    %15 = vector.broadcast %14 : vector<1x128xf32> to vector<8x128xf32>
    %16 = arith.addf %13, %15 : vector<8x128xf32>
    %17 = math.tanh %16 : vector<8x128xf32>
    %c0_13 = arith.constant 0 : index
    %c0_14 = arith.constant 0 : index
    %18 = vector.load %arg6[%c0_13, %c0_14] : memref<128x16xf32, #tpu.memory_space<vmem>>, vector<128x16xf32>
    %cst_15 = arith.constant dense<0.000000e+00> : vector<8x16xf32>
    %19 = tpu.matmul %17, %18, %cst_15 {dimension_numbers = #tpu.dot_dimension_numbers<[1], [0], [0], [1], [0, 0, 1, 1], [], []>} : vector<8x128xf32>, vector<128x16xf32>, vector<8x16xf32> -> vector<8x16xf32>
    %c3 = arith.constant 3 : index
    %c0_16 = arith.constant 0 : index
    %20 = vector.load %arg2[%c3, %c0_16] : memref<4x128xf32, #tpu.memory_space<vmem>>, vector<1x16xf32>
    %21 = vector.broadcast %20 : vector<1x16xf32> to vector<8x16xf32>
    %22 = arith.addf %19, %21 : vector<8x16xf32>
    %c0_17 = arith.constant 0 : index
    %c0_18 = arith.constant 0 : index
    %23 = vector.load %arg7[%c0_17, %c0_18] : memref<8x16xf32, #tpu.memory_space<vmem>>, vector<8x16xf32>
    tpu.vector_store %arg7[%c0_17, %c0_18], %22 {strides = array<i32>} : memref<8x16xf32, #tpu.memory_space<vmem>>, vector<8x16xf32>,
    return
  }
  func.func @transform_0(%arg0: i32) -> (i32, i32) {
    %c0_i32 = arith.constant 0 : i32
    %c0_i32_0 = arith.constant 0 : i32
    return %arg0, %c0_i32 : i32, i32
  }
  func.func @transform_1(%arg0: i32) -> (i32, i32) {
    %c0_i32 = arith.constant 0 : i32
    %c0_i32_0 = arith.constant 0 : i32
    %c0_i32_1 = arith.constant 0 : i32
    return %c0_i32, %c0_i32_0 : i32, i32
  }
  func.func @transform_2(%arg0: i32) -> (i32, i32) {
    %c0_i32 = arith.constant 0 : i32
    %c0_i32_0 = arith.constant 0 : i32
    %c0_i32_1 = arith.constant 0 : i32
    return %c0_i32, %c0_i32_0 : i32, i32
  }
  func.func @transform_3(%arg0: i32) -> (i32, i32) {
    %c0_i32 = arith.constant 0 : i32
    %c0_i32_0 = arith.constant 0 : i32
    %c0_i32_1 = arith.constant 0 : i32
    return %c0_i32, %c0_i32_0 : i32, i32
  }
  func.func @transform_4(%arg0: i32) -> (i32, i32) {
    %c0_i32 = arith.constant 0 : i32
    %c0_i32_0 = arith.constant 0 : i32
    %c0_i32_1 = arith.constant 0 : i32
    return %c0_i32, %c0_i32_0 : i32, i32
  }
  func.func @transform_5(%arg0: i32) -> (i32, i32) {
    %c0_i32 = arith.constant 0 : i32
    %c0_i32_0 = arith.constant 0 : i32
    %c0_i32_1 = arith.constant 0 : i32
    return %c0_i32, %c0_i32_0 : i32, i32
  }
  func.func @transform_6(%arg0: i32) -> (i32, i32) {
    %c0_i32 = arith.constant 0 : i32
    %c0_i32_0 = arith.constant 0 : i32
    return %arg0, %c0_i32 : i32, i32
  }
}

</mosaic_0001>

<llo_original>
// kernel: tpu_custom_call.1
$region0: #{tpu_custom_call.1}
  #allocation0 [shape = 'u32[]', space=smem, size = 0x4, offset = 0x4, fixed_abs, tag = 'smem constant byte address 0x4 - core index']
  #allocation1 [shape = 'u32[144,128]{1,0:T(1,128)}', space=vmem, size = 0x12000, scoped, tag = 'internal scratch']
  %s0 = inlined_call_operand.hbm [shape: f32[8,16], index: 0, kind: input, shape index: {}]
  %s1 = inlined_call_operand.hbm [shape: f32[4,128], index: 1, kind: input, shape index: {}]
  %s2 = inlined_call_operand.vmem [shape: f32[16,128], index: 2, kind: input, shape index: {}]
  %s3 = inlined_call_operand.vmem [shape: f32[128,128], index: 3, kind: input, shape index: {}]
  %s4 = inlined_call_operand.hbm [shape: f32[128,128], index: 4, kind: input, shape index: {}]
  %s5 = inlined_call_operand.vmem [shape: f32[128,16], index: 5, kind: input, shape index: {}]
  %s6 = inlined_call_operand.hbm [shape: f32[8,16], index: 6, kind: output, shape index: {}]
  %s7 = sld [smem:[#allocation0]]
  $region46: #{tpu_custom_call.1} parent=0
    _
  %s9 = ssub.s32 1, %s7
  %s10 = scalar_select 0, %s9, %s7
  $region1: #{tpu_custom_call.1} parent=0
    #allocation2 [shape = 'u8[4096]{0}', space=vmem, size = 0x1000, scoped, tag = 'input window, operand 0, single buffered']
    #allocation3 [shape = 's32[1]{0}', space=sflag, size = 0x4, scoped, tag = 'scoped memory for tpu_custom_call.1']
    #allocation4 [shape = 's32[1]{0}', space=sflag, size = 0x4, scoped, tag = 'scoped memory for tpu_custom_call.1']
    #allocation5 [shape = 'u8[2048]{0}', space=vmem, size = 0x800, scoped, tag = 'input window, operand 1, single buffered']
    #allocation6 [shape = 's32[1]{0}', space=sflag, size = 0x4, scoped, tag = 'scoped memory for tpu_custom_call.1']
    #allocation7 [shape = 'u8[65536]{0}', space=vmem, size = 0x10000, scoped, tag = 'input window, operand 4, single buffered']
    #allocation8 [shape = 'u8[4096]{0}', space=vmem, size = 0x1000, scoped, tag = 'output window, operand 0, single buffered']
    %11 = vsyncpa [#allocation3], 0
    %12 = vsyncpa [#allocation6], 0
    %13 = vsyncpa [#allocation4], 0
    // Predicated region
    $region2: #{tpu_custom_call.1} parent=1 // pred_check
      _
    $region3: #{tpu_custom_call.1} parent=1 // pred_check_branch
      %15 = sbr.rel (0) target = $region5
    $region4: #{tpu_custom_call.1} parent=1 // pred_region
      %s17 = ssub.s32 128, 128
      %18 = vsyncadd [#allocation3], %s17
      %s20 = sshll.u32 [#allocation2], 4
      %s21 = int_to_ptr.vmem [resolvable:$true] %s20
      %23 = dma.hbm_to_vmem [thread:$0]  %s0, 128, %s21, [#allocation3]
    $region5: #{tpu_custom_call.1} parent=1 // pred_fallthru
      _
    // Predicated region
    $region6: #{tpu_custom_call.1} parent=1 // pred_check
      _
    $region7: #{tpu_custom_call.1} parent=1 // pred_check_branch
      %25 = sbr.rel (0) target = $region9
    $region8: #{tpu_custom_call.1} parent=1 // pred_region
      %s27 = ssub.s32 64, 64
      %28 = vsyncadd [#allocation6], %s27
      %s30 = sshll.u32 [#allocation5], 4
      %s31 = int_to_ptr.vmem [resolvable:$true] %s30
      %33 = dma.hbm_to_vmem [thread:$0]  %s1, 64, %s31, [#allocation6]
    $region9: #{tpu_custom_call.1} parent=1 // pred_fallthru
      _
    // Predicated region
    $region10: #{tpu_custom_call.1} parent=1 // pred_check
      _
    $region11: #{tpu_custom_call.1} parent=1 // pred_check_branch
      %35 = sbr.rel (0) target = $region13
    $region12: #{tpu_custom_call.1} parent=1 // pred_region
      _
    $region13: #{tpu_custom_call.1} parent=1 // pred_fallthru
      _
    // Predicated region
    $region14: #{tpu_custom_call.1} parent=1 // pred_check
      _
    $region15: #{tpu_custom_call.1} parent=1 // pred_check_branch
      %37 = sbr.rel (0) target = $region17
    $region16: #{tpu_custom_call.1} parent=1 // pred_region
      _
    $region17: #{tpu_custom_call.1} parent=1 // pred_fallthru
      _
    // Predicated region
    $region18: #{tpu_custom_call.1} parent=1 // pred_check
      _
    $region19: #{tpu_custom_call.1} parent=1 // pred_check_branch
      %39 = sbr.rel (0) target = $region21
    $region20: #{tpu_custom_call.1} parent=1 // pred_region
      %s41 = ssub.s32 2048, 2048
      %42 = vsyncadd [#allocation6], %s41
      %s43 = sshll.u32 [#allocation7], 4
      %s44 = int_to_ptr.vmem [resolvable:$true] %s43
      %49 = dma.hbm_to_vmem [thread:$0]  %s4, 2048, %s44, [#allocation6], 128, 128, 8
    $region21: #{tpu_custom_call.1} parent=1 // pred_fallthru
      _
    // Predicated region
    $region22: #{tpu_custom_call.1} parent=1 // pred_check
      _
    $region23: #{tpu_custom_call.1} parent=1 // pred_check_branch
      %51 = sbr.rel (0) target = $region25
    $region24: #{tpu_custom_call.1} parent=1 // pred_region
      _
    $region25: #{tpu_custom_call.1} parent=1 // pred_fallthru
      _
    // Predicated region
    $region26: #{tpu_custom_call.1} parent=1 // pred_check
      _
    $region27: #{tpu_custom_call.1} parent=1 // pred_check_branch
      %53 = sbr.rel (0) target = $region29
    $region28: #{tpu_custom_call.1} parent=1 // pred_region
      %54 = dma.done [#allocation3], 128
    $region29: #{tpu_custom_call.1} parent=1 // pred_fallthru
      _
    // Predicated region
    $region30: #{tpu_custom_call.1} parent=1 // pred_check
      _
    $region31: #{tpu_custom_call.1} parent=1 // pred_check_branch
      %56 = sbr.rel (0) target = $region33
    $region32: #{tpu_custom_call.1} parent=1 // pred_region
      %57 = dma.done [#allocation6], 64
    $region33: #{tpu_custom_call.1} parent=1 // pred_fallthru
      _
    // Predicated region
    $region34: #{tpu_custom_call.1} parent=1 // pred_check
      _
    $region35: #{tpu_custom_call.1} parent=1 // pred_check_branch
      %59 = sbr.rel (0) target = $region37
    $region36: #{tpu_custom_call.1} parent=1 // pred_region
      %60 = dma.done [#allocation6], 2048
    $region37: #{tpu_custom_call.1} parent=1 // pred_fallthru
      _
    %v61 = vld [vmem:[#allocation2] sm:$0xff]
    %v62 = vld [vmem:[%s2] sm:$0xff]
    %v63 = vld [vmem:[%s2 + $0x8] sm:$0xff]
    %v64 = vld [vmem:[#allocation5] sm:$0x1]
    %v65 = vlaneseq
    %v66 = vshrl.u32 %v65, 7
    %v67 = vsub.s32 0, %v66
    %v68 = vrot.slane %v64, %v67
    %vm69 = vcmask 130048
    %v71 = vsel %vm69, %v61, 0
    %73 = vmatprep.subr.mxu0 0.0
    %74 = vmatpush1.msra.mxu0 %v62
    %75 = vmatprep.subr.mxu0 0.0
    %76 = vmatpush1.msra.mxu0 %v63
    %77 = vmatprep.subr.mxu0 0.0
    %78 = vmatpush1.msra.mxu0 0.0
    %79 = vmatprep.subr.mxu0 0.0
    %80 = vmatpush1.msra.mxu0 0.0
    %81 = vmatprep.subr.mxu0 0.0
    %82 = vmatpush1.msra.mxu0 0.0
    %83 = vmatprep.subr.mxu0 0.0
    %84 = vmatpush1.msra.mxu0 0.0
    %85 = vmatprep.subr.mxu0 0.0
    %86 = vmatpush1.msra.mxu0 0.0
    %87 = vmatprep.subr.mxu0 0.0
    %88 = vmatpush1.msra.mxu0 0.0
    %89 = vmatprep.subr.mxu0 0.0
    %90 = vmatpush1.msra.mxu0 0.0
    %91 = vmatprep.subr.mxu0 0.0
    %92 = vmatpush1.msra.mxu0 0.0
    %93 = vmatprep.subr.mxu0 0.0
    %94 = vmatpush1.msra.mxu0 0.0
    %95 = vmatprep.subr.mxu0 0.0
    %96 = vmatpush1.msra.mxu0 0.0
    %97 = vmatprep.subr.mxu0 0.0
    %98 = vmatpush1.msra.mxu0 0.0
    %99 = vmatprep.subr.mxu0 0.0
    %100 = vmatpush1.msra.mxu0 0.0
    %101 = vmatprep.subr.mxu0 0.0
    %102 = vmatpush1.msra.mxu0 0.0
    %103 = vmatprep.subr.mxu0 0.0
    %104 = vmatpush1.msra.mxu0 0.0
    %105 = vmatprep.subr.mxu0 0.0
    %106 = vmatpush1.msra.mxu0 0.0
    %107 = vmatprep.subr.mxu0 0.0
    %108 = vmatpush1.msra.mxu0 0.0
    %109 = vmatprep.subr.mxu0 0.0
    %110 = vmatpush1.msra.mxu0 0.0
    %111 = vmatprep.subr.mxu0 0.0
    %112 = vmatpush1.msra.mxu0 0.0
    %113 = vmatprep.subr.mxu0 0.0
    %114 = vmatpush1.msra.mxu0 0.0
    %115 = vmatprep.subr.mxu0 0.0
    %116 = vmatpush1.msra.mxu0 0.0
    %117 = vmatprep.subr.mxu0 0.0
    %118 = vmatpush1.msra.mxu0 0.0
    %119 = vmatprep.subr.mxu0 0.0
    %120 = vmatpush1.msra.mxu0 0.0
    %121 = vmatprep.subr.mxu0 0.0
    %122 = vmatpush1.msra.mxu0 0.0
    %123 = vmatprep.subr.mxu0 0.0
    %124 = vmatpush1.msra.mxu0 0.0
    %125 = vmatprep.subr.mxu0 0.0
    %126 = vmatpush1.msra.mxu0 0.0
    %127 = vmatprep.subr.mxu0 0.0
    %128 = vmatpush1.msra.mxu0 0.0
    %129 = vmatprep.subr.mxu0 0.0
    %130 = vmatpush1.msra.mxu0 0.0
    %131 = vmatprep.subr.mxu0 0.0
    %132 = vmatpush1.msra.mxu0 0.0
    %133 = vmatprep.subr.mxu0 0.0
    %134 = vmatpush1.msra.mxu0 0.0
    %135 = vmatprep.subr.mxu0 0.0
    %136 = vmatpush1.msra.mxu0 0.0
    %137 = vmatprep.mubr.f32.mxu0 0.0
    %138 = vmatmul.mubr.f32.gmra.mrb[0].mxu0 %v71
    %v139 = vpop.f32.mrb[0].mxu0
    %v140 = vadd.f32 %v68, %v139
    %v141 = vpop.f32.mrb[0].mxu0
    %142 = vdwg.mxu0
    %v143 = vtanh.pop %v140
    %v144 = vld [vmem:[%s3] sm:$0xff]
    %v145 = vld [vmem:[%s3 + $0x8] sm:$0xff]
    %v146 = vld [vmem:[%s3 + $0x10] sm:$0xff]
    %v147 = vld [vmem:[%s3 + $0x18] sm:$0xff]
    %v148 = vld [vmem:[%s3 + $0x20] sm:$0xff]
    %v149 = vld [vmem:[%s3 + $0x28] sm:$0xff]
    %v150 = vld [vmem:[%s3 + $0x30] sm:$0xff]
    %v151 = vld [vmem:[%s3 + $0x38] sm:$0xff]
    %v152 = vld [vmem:[%s3 + $0x40] sm:$0xff]
    %v153 = vld [vmem:[%s3 + $0x48] sm:$0xff]
    %v154 = vld [vmem:[%s3 + $0x50] sm:$0xff]
    %v155 = vld [vmem:[%s3 + $0x58] sm:$0xff]
    %v156 = vld [vmem:[%s3 + $0x60] sm:$0xff]
    %v157 = vld [vmem:[%s3 + $0x68] sm:$0xff]
    %v158 = vld [vmem:[%s3 + $0x70] sm:$0xff]
    %v159 = vld [vmem:[%s3 + $0x78] sm:$0xff]
    %v160 = vld [vmem:[#allocation5 + $0x1] sm:$0x1]
    %v161 = vlaneseq
    %v162 = vshrl.u32 %v161, 7
    %v163 = vsub.s32 0, %v162
    %v164 = vrot.slane %v160, %v163
    %165 = vmatprep.subr.mxu0 0.0
    %166 = vmatpush1.msra.mxu0 %v144
    %167 = vmatprep.subr.mxu0 0.0
    %168 = vmatpush1.msra.mxu0 %v145
    %169 = vmatprep.subr.mxu0 0.0
    %170 = vmatpush1.msra.mxu0 %v146
    %171 = vmatprep.subr.mxu0 0.0
    %172 = vmatpush1.msra.mxu0 %v147
    %173 = vmatprep.subr.mxu0 0.0
    %174 = vmatpush1.msra.mxu0 %v148
    %175 = vmatprep.subr.mxu0 0.0
    %176 = vmatpush1.msra.mxu0 %v149
    %177 = vmatprep.subr.mxu0 0.0
    %178 = vmatpush1.msra.mxu0 %v150
    %179 = vmatprep.subr.mxu0 0.0
    %180 = vmatpush1.msra.mxu0 %v151
    %181 = vmatprep.subr.mxu0 0.0
    %182 = vmatpush1.msra.mxu0 %v152
    %183 = vmatprep.subr.mxu0 0.0
    %184 = vmatpush1.msra.mxu0 %v153
    %185 = vmatprep.subr.mxu0 0.0
    %186 = vmatpush1.msra.mxu0 %v154
    %187 = vmatprep.subr.mxu0 0.0
    %188 = vmatpush1.msra.mxu0 %v155
    %189 = vmatprep.subr.mxu0 0.0
    %190 = vmatpush1.msra.mxu0 %v156
    %191 = vmatprep.subr.mxu0 0.0
    %192 = vmatpush1.msra.mxu0 %v157
    %193 = vmatprep.subr.mxu0 0.0
    %194 = vmatpush1.msra.mxu0 %v158
    %195 = vmatprep.subr.mxu0 0.0
    %196 = vmatpush1.msra.mxu0 %v159
    %197 = vmatprep.subr.mxu0 0.0
    %198 = vmatpush1.msra.mxu0 0.0
    %199 = vmatprep.subr.mxu0 0.0
    %200 = vmatpush1.msra.mxu0 0.0
    %201 = vmatprep.subr.mxu0 0.0
    %202 = vmatpush1.msra.mxu0 0.0
    %203 = vmatprep.subr.mxu0 0.0
    %204 = vmatpush1.msra.mxu0 0.0
    %205 = vmatprep.subr.mxu0 0.0
    %206 = vmatpush1.msra.mxu0 0.0
    %207 = vmatprep.subr.mxu0 0.0
    %208 = vmatpush1.msra.mxu0 0.0
    %209 = vmatprep.subr.mxu0 0.0
    %210 = vmatpush1.msra.mxu0 0.0
    %211 = vmatprep.subr.mxu0 0.0
    %212 = vmatpush1.msra.mxu0 0.0
    %213 = vmatprep.subr.mxu0 0.0
    %214 = vmatpush1.msra.mxu0 0.0
    %215 = vmatprep.subr.mxu0 0.0
    %216 = vmatpush1.msra.mxu0 0.0
    %217 = vmatprep.subr.mxu0 0.0
    %218 = vmatpush1.msra.mxu0 0.0
    %219 = vmatprep.subr.mxu0 0.0
    %220 = vmatpush1.msra.mxu0 0.0
    %221 = vmatprep.subr.mxu0 0.0
    %222 = vmatpush1.msra.mxu0 0.0
    %223 = vmatprep.subr.mxu0 0.0
    %224 = vmatpush1.msra.mxu0 0.0
    %225 = vmatprep.subr.mxu0 0.0
    %226 = vmatpush1.msra.mxu0 0.0
    %227 = vmatprep.subr.mxu0 0.0
    %228 = vmatpush1.msra.mxu0 0.0
    %229 = vmatprep.mubr.f32.mxu0 0.0
    %230 = vmatmul.mubr.f32.gmra.mrb[0].mxu0 %v143
    %v231 = vpop.f32.mrb[0].mxu0
    %v232 = vadd.f32 %v164, %v231
    %v233 = vpop.f32.mrb[0].mxu0
    %234 = vdwg.mxu0
    %v235 = vld [vmem:[#allocation7] sm:$0xff]
    %v236 = vld [vmem:[#allocation7 + $0x8] sm:$0xff]
    %v237 = vld [vmem:[#allocation7 + $0x10] sm:$0xff]
    %v238 = vld [vmem:[#allocation7 + $0x18] sm:$0xff]
    %v239 = vld [vmem:[#allocation7 + $0x20] sm:$0xff]
    %v240 = vld [vmem:[#allocation7 + $0x28] sm:$0xff]
    %v241 = vld [vmem:[#allocation7 + $0x30] sm:$0xff]
    %v242 = vld [vmem:[#allocation7 + $0x38] sm:$0xff]
    %v243 = vld [vmem:[#allocation7 + $0x40] sm:$0xff]
    %v244 = vld [vmem:[#allocation7 + $0x48] sm:$0xff]
    %v245 = vld [vmem:[#allocation7 + $0x50] sm:$0xff]
    %v246 = vld [vmem:[#allocation7 + $0x58] sm:$0xff]
    %v247 = vld [vmem:[#allocation7 + $0x60] sm:$0xff]
    %v248 = vld [vmem:[#allocation7 + $0x68] sm:$0xff]
    %v249 = vld [vmem:[#allocation7 + $0x70] sm:$0xff]
    %v250 = vld [vmem:[#allocation7 + $0x78] sm:$0xff]
    %v251 = vld [vmem:[#allocation5 + $0x2] sm:$0x1]
    %v252 = vlaneseq
    %v253 = vshrl.u32 %v252, 7
    %v254 = vsub.s32 0, %v253
    %v255 = vrot.slane %v251, %v254
    %256 = vmatprep.subr.mxu0 0.0
    %257 = vmatpush1.msra.mxu0 %v235
    %258 = vmatprep.subr.mxu0 0.0
    %259 = vmatpush1.msra.mxu0 %v236
    %260 = vmatprep.subr.mxu0 0.0
    %261 = vmatpush1.msra.mxu0 %v237
    %262 = vmatprep.subr.mxu0 0.0
    %263 = vmatpush1.msra.mxu0 %v238
    %264 = vmatprep.subr.mxu0 0.0
    %265 = vmatpush1.msra.mxu0 %v239
    %266 = vmatprep.subr.mxu0 0.0
    %267 = vmatpush1.msra.mxu0 %v240
    %268 = vmatprep.subr.mxu0 0.0
    %269 = vmatpush1.msra.mxu0 %v241
    %270 = vmatprep.subr.mxu0 0.0
    %271 = vmatpush1.msra.mxu0 %v242
    %272 = vmatprep.subr.mxu0 0.0
    %273 = vmatpush1.msra.mxu0 %v243
    %274 = vmatprep.subr.mxu0 0.0
    %275 = vmatpush1.msra.mxu0 %v244
    %276 = vmatprep.subr.mxu0 0.0
    %277 = vmatpush1.msra.mxu0 %v245
    %278 = vmatprep.subr.mxu0 0.0
    %279 = vmatpush1.msra.mxu0 %v246
    %280 = vmatprep.subr.mxu0 0.0
    %281 = vmatpush1.msra.mxu0 %v247
    %282 = vmatprep.subr.mxu0 0.0
    %283 = vmatpush1.msra.mxu0 %v248
    %284 = vmatprep.subr.mxu0 0.0
    %285 = vmatpush1.msra.mxu0 %v249
    %286 = vmatprep.subr.mxu0 0.0
    %287 = vmatpush1.msra.mxu0 %v250
    %288 = vmatprep.subr.mxu0 0.0
    %289 = vmatpush1.msra.mxu0 0.0
    %290 = vmatprep.subr.mxu0 0.0
    %291 = vmatpush1.msra.mxu0 0.0
    %292 = vmatprep.subr.mxu0 0.0
    %293 = vmatpush1.msra.mxu0 0.0
    %294 = vmatprep.subr.mxu0 0.0
    %295 = vmatpush1.msra.mxu0 0.0
    %296 = vmatprep.subr.mxu0 0.0
    %297 = vmatpush1.msra.mxu0 0.0
    %298 = vmatprep.subr.mxu0 0.0
    %299 = vmatpush1.msra.mxu0 0.0
    %300 = vmatprep.subr.mxu0 0.0
    %301 = vmatpush1.msra.mxu0 0.0
    %302 = vmatprep.subr.mxu0 0.0
    %303 = vmatpush1.msra.mxu0 0.0
    %304 = vmatprep.subr.mxu0 0.0
    %305 = vmatpush1.msra.mxu0 0.0
    %306 = vmatprep.subr.mxu0 0.0
    %307 = vmatpush1.msra.mxu0 0.0
    %308 = vmatprep.subr.mxu0 0.0
    %309 = vmatpush1.msra.mxu0 0.0
    %310 = vmatprep.subr.mxu0 0.0
    %311 = vmatpush1.msra.mxu0 0.0
    %312 = vmatprep.subr.mxu0 0.0
    %313 = vmatpush1.msra.mxu0 0.0
    %314 = vmatprep.subr.mxu0 0.0
    %315 = vmatpush1.msra.mxu0 0.0
    %316 = vmatprep.subr.mxu0 0.0
    %317 = vmatpush1.msra.mxu0 0.0
    %318 = vmatprep.subr.mxu0 0.0
    %319 = vmatpush1.msra.mxu0 0.0
    %320 = vmatprep.mubr.f32.mxu0 0.0
    %321 = vmatmul.mubr.f32.gmra.mrb[0].mxu0 %v232
    %v322 = vpop.f32.mrb[0].mxu0
    %v323 = vadd.f32 %v255, %v322
    %v324 = vpop.f32.mrb[0].mxu0
    %325 = vdwg.mxu0
    %v326 = vtanh.pop %v323
    %v327 = vld [vmem:[%s5] sm:$0xff]
    %v328 = vld [vmem:[%s5 + $0x8] sm:$0xff]
    %v329 = vld [vmem:[%s5 + $0x10] sm:$0xff]
    %v330 = vld [vmem:[%s5 + $0x18] sm:$0xff]
    %v331 = vld [vmem:[%s5 + $0x20] sm:$0xff]
    %v332 = vld [vmem:[%s5 + $0x28] sm:$0xff]
    %v333 = vld [vmem:[%s5 + $0x30] sm:$0xff]
    %v334 = vld [vmem:[%s5 + $0x38] sm:$0xff]
    %v335 = vld [vmem:[%s5 + $0x40] sm:$0xff]
    %v336 = vld [vmem:[%s5 + $0x48] sm:$0xff]
    %v337 = vld [vmem:[%s5 + $0x50] sm:$0xff]
    %v338 = vld [vmem:[%s5 + $0x58] sm:$0xff]
    %v339 = vld [vmem:[%s5 + $0x60] sm:$0xff]
    %v340 = vld [vmem:[%s5 + $0x68] sm:$0xff]
    %v341 = vld [vmem:[%s5 + $0x70] sm:$0xff]
    %v342 = vld [vmem:[%s5 + $0x78] sm:$0xff]
    %v343 = vld [vmem:[#allocation5 + $0x3] sm:$0x1]
    %v344 = vlaneseq
    %v345 = vshrl.u32 %v344, 7
    %v346 = vsub.s32 0, %v345
    %v347 = vrot.slane %v343, %v346
    %348 = vmatprep.subr.mxu0 0.0
    %349 = vmatpush1.msra.mxu0 %v327
    %350 = vmatprep.subr.mxu0 0.0
    %351 = vmatpush1.msra.mxu0 %v328
    %352 = vmatprep.subr.mxu0 0.0
    %353 = vmatpush1.msra.mxu0 %v329
    %354 = vmatprep.subr.mxu0 0.0
    %355 = vmatpush1.msra.mxu0 %v330
    %356 = vmatprep.subr.mxu0 0.0
    %357 = vmatpush1.msra.mxu0 %v331
    %358 = vmatprep.subr.mxu0 0.0
    %359 = vmatpush1.msra.mxu0 %v332
    %360 = vmatprep.subr.mxu0 0.0
    %361 = vmatpush1.msra.mxu0 %v333
    %362 = vmatprep.subr.mxu0 0.0
    %363 = vmatpush1.msra.mxu0 %v334
    %364 = vmatprep.subr.mxu0 0.0
    %365 = vmatpush1.msra.mxu0 %v335
    %366 = vmatprep.subr.mxu0 0.0
    %367 = vmatpush1.msra.mxu0 %v336
    %368 = vmatprep.subr.mxu0 0.0
    %369 = vmatpush1.msra.mxu0 %v337
    %370 = vmatprep.subr.mxu0 0.0
    %371 = vmatpush1.msra.mxu0 %v338
    %372 = vmatprep.subr.mxu0 0.0
    %373 = vmatpush1.msra.mxu0 %v339
    %374 = vmatprep.subr.mxu0 0.0
    %375 = vmatpush1.msra.mxu0 %v340
    %376 = vmatprep.subr.mxu0 0.0
    %377 = vmatpush1.msra.mxu0 %v341
    %378 = vmatprep.subr.mxu0 0.0
    %379 = vmatpush1.msra.mxu0 %v342
    %380 = vmatprep.subr.mxu0 0.0
    %381 = vmatpush1.msra.mxu0 0.0
    %382 = vmatprep.subr.mxu0 0.0
    %383 = vmatpush1.msra.mxu0 0.0
    %384 = vmatprep.subr.mxu0 0.0
    %385 = vmatpush1.msra.mxu0 0.0
    %386 = vmatprep.subr.mxu0 0.0
    %387 = vmatpush1.msra.mxu0 0.0
    %388 = vmatprep.subr.mxu0 0.0
    %389 = vmatpush1.msra.mxu0 0.0
    %390 = vmatprep.subr.mxu0 0.0
    %391 = vmatpush1.msra.mxu0 0.0
    %392 = vmatprep.subr.mxu0 0.0
    %393 = vmatpush1.msra.mxu0 0.0
    %394 = vmatprep.subr.mxu0 0.0
    %395 = vmatpush1.msra.mxu0 0.0
    %396 = vmatprep.subr.mxu0 0.0
    %397 = vmatpush1.msra.mxu0 0.0
    %398 = vmatprep.subr.mxu0 0.0
    %399 = vmatpush1.msra.mxu0 0.0
    %400 = vmatprep.subr.mxu0 0.0
    %401 = vmatpush1.msra.mxu0 0.0
    %402 = vmatprep.subr.mxu0 0.0
    %403 = vmatpush1.msra.mxu0 0.0
    %404 = vmatprep.subr.mxu0 0.0
    %405 = vmatpush1.msra.mxu0 0.0
    %406 = vmatprep.subr.mxu0 0.0
    %407 = vmatpush1.msra.mxu0 0.0
    %408 = vmatprep.subr.mxu0 0.0
    %409 = vmatpush1.msra.mxu0 0.0
    %410 = vmatprep.subr.mxu0 0.0
    %411 = vmatpush1.msra.mxu0 0.0
    %412 = vmatprep.mubr.f32.mxu0 0.0
    %413 = vmatmul.mubr.f32.gmra.mrb[0].mxu0 %v326
    %v414 = vpop.f32.mrb[0].mxu0
    %v415 = vadd.f32 %v347, %v414
    %v416 = vpop.f32.mrb[0].mxu0
    %417 = vdwg.mxu0
    %418 = vst.msk [vmem:[#allocation8] sm:$0xff] %vm69, %v415
    // Predicated region
    $region38: #{tpu_custom_call.1} parent=1 // pred_check
      _
    $region39: #{tpu_custom_call.1} parent=1 // pred_check_branch
      %420 = sbr.rel (0) target = $region41
    $region40: #{tpu_custom_call.1} parent=1 // pred_region
      %s422 = ssub.s32 128, 128
      %423 = vsyncadd [#allocation4], %s422
      %s425 = sshll.u32 [#allocation8], 4
      %s426 = int_to_ptr.vmem [resolvable:$true] %s425
      %428 = dma.vmem_to_hbm [thread:$0]  %s426, 128, %s6, [#allocation4]
    $region41: #{tpu_custom_call.1} parent=1 // pred_fallthru
      _
    // Predicated region
    $region42: #{tpu_custom_call.1} parent=1 // pred_check
      _
    $region43: #{tpu_custom_call.1} parent=1 // pred_check_branch
      %430 = sbr.rel (0) target = $region45
    $region44: #{tpu_custom_call.1} parent=1 // pred_region
      %431 = dma.done [#allocation4], 128
    $region45: #{tpu_custom_call.1} parent=1 // pred_fallthru
      _
    %432 = vsyncpa [#allocation3], 1
    %433 = vsyncpa [#allocation6], 1
    %434 = vsyncpa [#allocation4], 1

// kernel: tpu_custom_call.1
$region0: #{tpu_custom_call.1}
  #allocation0 [shape = 'u32[]', space=smem, size = 0x4, offset = 0x4, fixed_abs, tag = 'smem constant byte address 0x4 - core index']
  #allocation1 [shape = 'u32[144,128]{1,0:T(1,128)}', space=vmem, size = 0x12000, scoped, tag = 'internal scratch']
  %s0 = inlined_call_operand.hbm [shape: f32[8,16], index: 0, kind: input, shape index: {}]
  %s1 = inlined_call_operand.hbm [shape: f32[4,128], index: 1, kind: input, shape index: {}]
  %s2 = inlined_call_operand.vmem [shape: f32[16,128], index: 2, kind: input, shape index: {}]
  %s3 = inlined_call_operand.vmem [shape: f32[128,128], index: 3, kind: input, shape index: {}]
  %s4 = inlined_call_operand.hbm [shape: f32[128,128], index: 4, kind: input, shape index: {}]
  %s5 = inlined_call_operand.vmem [shape: f32[128,16], index: 5, kind: input, shape index: {}]
  %s6 = inlined_call_operand.hbm [shape: f32[8,16], index: 6, kind: output, shape index: {}]
  %s7 = sld [smem:[#allocation0]]
  $region46: #{tpu_custom_call.1} parent=0
    _
  %s9 = ssub.s32 1, %s7
  %s10 = scalar_select 0, %s9, %s7
  $region1: #{tpu_custom_call.1} parent=0
    #allocation2 [shape = 'u8[4096]{0}', space=vmem, size = 0x1000, scoped, tag = 'input window, operand 0, single buffered']
    #allocation3 [shape = 's32[1]{0}', space=sflag, size = 0x4, scoped, tag = 'scoped memory for tpu_custom_call.1']
    #allocation4 [shape = 's32[1]{0}', space=sflag, size = 0x4, scoped, tag = 'scoped memory for tpu_custom_call.1']
    #allocation5 [shape = 'u8[2048]{0}', space=vmem, size = 0x800, scoped, tag = 'input window, operand 1, single buffered']
    #allocation6 [shape = 's32[1]{0}', space=sflag, size = 0x4, scoped, tag = 'scoped memory for tpu_custom_call.1']
    #allocation7 [shape = 'u8[65536]{0}', space=vmem, size = 0x10000, scoped, tag = 'input window, operand 4, single buffered']
    #allocation8 [shape = 'u8[4096]{0}', space=vmem, size = 0x1000, scoped, tag = 'output window, operand 0, single buffered']
    %11 = vsyncpa [#allocation3], 0
    %12 = vsyncpa [#allocation6], 0
    %13 = vsyncpa [#allocation4], 0
    // Predicated region
    $region2: #{tpu_custom_call.1} parent=1 // pred_check
      _
    $region3: #{tpu_custom_call.1} parent=1 // pred_check_branch
      %15 = sbr.rel (0) target = $region5
    $region4: #{tpu_custom_call.1} parent=1 // pred_region
      %s17 = ssub.s32 128, 128
      %18 = vsyncadd [#allocation3], %s17
      %s20 = sshll.u32 [#allocation2], 4
      %s21 = int_to_ptr.vmem [resolvable:$true] %s20
      %23 = dma.hbm_to_vmem [thread:$0]  %s0, 128, %s21, [#allocation3]
    $region5: #{tpu_custom_call.1} parent=1 // pred_fallthru
      _
    // Predicated region
    $region6: #{tpu_custom_call.1} parent=1 // pred_check
      _
    $region7: #{tpu_custom_call.1} parent=1 // pred_check_branch
      %25 = sbr.rel (0) target = $region9
    $region8: #{tpu_custom_call.1} parent=1 // pred_region
      %s27 = ssub.s32 64, 64
      %28 = vsyncadd [#allocation6], %s27
      %s30 = sshll.u32 [#allocation5], 4
      %s31 = int_to_ptr.vmem [resolvable:$true] %s30
      %33 = dma.hbm_to_vmem [thread:$0]  %s1, 64, %s31, [#allocation6]
    $region9: #{tpu_custom_call.1} parent=1 // pred_fallthru
      _
    // Predicated region
    $region10: #{tpu_custom_call.1} parent=1 // pred_check
      _
    $region11: #{tpu_custom_call.1} parent=1 // pred_check_branch
      %35 = sbr.rel (0) target = $region13
    $region12: #{tpu_custom_call.1} parent=1 // pred_region
      _
    $region13: #{tpu_custom_call.1} parent=1 // pred_fallthru
      _
    // Predicated region
    $region14: #{tpu_custom_call.1} parent=1 // pred_check
      _
    $region15: #{tpu_custom_call.1} parent=1 // pred_check_branch
      %37 = sbr.rel (0) target = $region17
    $region16: #{tpu_custom_call.1} parent=1 // pred_region
      _
    $region17: #{tpu_custom_call.1} parent=1 // pred_fallthru
      _
    // Predicated region
    $region18: #{tpu_custom_call.1} parent=1 // pred_check
      _
    $region19: #{tpu_custom_call.1} parent=1 // pred_check_branch
      %39 = sbr.rel (0) target = $region21
    $region20: #{tpu_custom_call.1} parent=1 // pred_region
      %s41 = ssub.s32 2048, 2048
      %42 = vsyncadd [#allocation6], %s41
      %s43 = sshll.u32 [#allocation7], 4
      %s44 = int_to_ptr.vmem [resolvable:$true] %s43
      %49 = dma.hbm_to_vmem [thread:$0]  %s4, 2048, %s44, [#allocation6], 128, 128, 8
    $region21: #{tpu_custom_call.1} parent=1 // pred_fallthru
      _
    // Predicated region
    $region22: #{tpu_custom_call.1} parent=1 // pred_check
      _
    $region23: #{tpu_custom_call.1} parent=1 // pred_check_branch
      %51 = sbr.rel (0) target = $region25
    $region24: #{tpu_custom_call.1} parent=1 // pred_region
      _
    $region25: #{tpu_custom_call.1} parent=1 // pred_fallthru
      _
    // Predicated region
    $region26: #{tpu_custom_call.1} parent=1 // pred_check
      _
    $region27: #{tpu_custom_call.1} parent=1 // pred_check_branch
      %53 = sbr.rel (0) target = $region29
    $region28: #{tpu_custom_call.1} parent=1 // pred_region
      %54 = dma.done [#allocation3], 128
    $region29: #{tpu_custom_call.1} parent=1 // pred_fallthru
      _
    // Predicated region
    $region30: #{tpu_custom_call.1} parent=1 // pred_check
      _
    $region31: #{tpu_custom_call.1} parent=1 // pred_check_branch
      %56 = sbr.rel (0) target = $region33
    $region32: #{tpu_custom_call.1} parent=1 // pred_region
      %57 = dma.done [#allocation6], 64
    $region33: #{tpu_custom_call.1} parent=1 // pred_fallthru
      _
    // Predicated region
    $region34: #{tpu_custom_call.1} parent=1 // pred_check
      _
    $region35: #{tpu_custom_call.1} parent=1 // pred_check_branch
      %59 = sbr.rel (0) target = $region37
    $region36: #{tpu_custom_call.1} parent=1 // pred_region
      %60 = dma.done [#allocation6], 2048
    $region37: #{tpu_custom_call.1} parent=1 // pred_fallthru
      _
    %v61 = vld [vmem:[#allocation2] sm:$0xff]
    %v62 = vld [vmem:[%s2] sm:$0xff]
    %v63 = vld [vmem:[%s2 + $0x8] sm:$0xff]
    %v64 = vld [vmem:[#allocation5] sm:$0x1]
    %v65 = vlaneseq
    %v66 = vshrl.u32 %v65, 7
    %v67 = vsub.s32 0, %v66
    %v68 = vrot.slane %v64, %v67
    %vm69 = vcmask 130048
    %v71 = vsel %vm69, %v61, 0
    %73 = vmatprep.subr.mxu0 0.0
    %74 = vmatpush1.msra.mxu0 %v62
    %75 = vmatprep.subr.mxu0 0.0
    %76 = vmatpush1.msra.mxu0 %v63
    %77 = vmatprep.subr.mxu0 0.0
    %78 = vmatpush1.msra.mxu0 0.0
    %79 = vmatprep.subr.mxu0 0.0
    %80 = vmatpush1.msra.mxu0 0.0
    %81 = vmatprep.subr.mxu0 0.0
    %82 = vmatpush1.msra.mxu0 0.0
    %83 = vmatprep.subr.mxu0 0.0
    %84 = vmatpush1.msra.mxu0 0.0
    %85 = vmatprep.subr.mxu0 0.0
    %86 = vmatpush1.msra.mxu0 0.0
    %87 = vmatprep.subr.mxu0 0.0
    %88 = vmatpush1.msra.mxu0 0.0
    %89 = vmatprep.subr.mxu0 0.0
    %90 = vmatpush1.msra.mxu0 0.0
    %91 = vmatprep.subr.mxu0 0.0
    %92 = vmatpush1.msra.mxu0 0.0
    %93 = vmatprep.subr.mxu0 0.0
    %94 = vmatpush1.msra.mxu0 0.0
    %95 = vmatprep.subr.mxu0 0.0
    %96 = vmatpush1.msra.mxu0 0.0
    %97 = vmatprep.subr.mxu0 0.0
    %98 = vmatpush1.msra.mxu0 0.0
    %99 = vmatprep.subr.mxu0 0.0
    %100 = vmatpush1.msra.mxu0 0.0
    %101 = vmatprep.subr.mxu0 0.0
    %102 = vmatpush1.msra.mxu0 0.0
    %103 = vmatprep.subr.mxu0 0.0
    %104 = vmatpush1.msra.mxu0 0.0
    %105 = vmatprep.subr.mxu0 0.0
    %106 = vmatpush1.msra.mxu0 0.0
    %107 = vmatprep.subr.mxu0 0.0
    %108 = vmatpush1.msra.mxu0 0.0
    %109 = vmatprep.subr.mxu0 0.0
    %110 = vmatpush1.msra.mxu0 0.0
    %111 = vmatprep.subr.mxu0 0.0
    %112 = vmatpush1.msra.mxu0 0.0
    %113 = vmatprep.subr.mxu0 0.0
    %114 = vmatpush1.msra.mxu0 0.0
    %115 = vmatprep.subr.mxu0 0.0
    %116 = vmatpush1.msra.mxu0 0.0
    %117 = vmatprep.subr.mxu0 0.0
    %118 = vmatpush1.msra.mxu0 0.0
    %119 = vmatprep.subr.mxu0 0.0
    %120 = vmatpush1.msra.mxu0 0.0
    %121 = vmatprep.subr.mxu0 0.0
    %122 = vmatpush1.msra.mxu0 0.0
    %123 = vmatprep.subr.mxu0 0.0
    %124 = vmatpush1.msra.mxu0 0.0
    %125 = vmatprep.subr.mxu0 0.0
    %126 = vmatpush1.msra.mxu0 0.0
    %127 = vmatprep.subr.mxu0 0.0
    %128 = vmatpush1.msra.mxu0 0.0
    %129 = vmatprep.subr.mxu0 0.0
    %130 = vmatpush1.msra.mxu0 0.0
    %131 = vmatprep.subr.mxu0 0.0
    %132 = vmatpush1.msra.mxu0 0.0
    %133 = vmatprep.subr.mxu0 0.0
    %134 = vmatpush1.msra.mxu0 0.0
    %135 = vmatprep.subr.mxu0 0.0
    %136 = vmatpush1.msra.mxu0 0.0
    %137 = vmatprep.mubr.f32.mxu0 0.0
    %138 = vmatmul.mubr.f32.gmra.mrb[0].mxu0 %v71
    %v139 = vpop.f32.mrb[0].mxu0
    %v140 = vadd.f32 %v68, %v139
    %v141 = vpop.f32.mrb[0].mxu0
    %142 = vdwg.mxu0
    %v143 = vtanh.pop %v140
    %v144 = vld [vmem:[%s3] sm:$0xff]
    %v145 = vld [vmem:[%s3 + $0x8] sm:$0xff]
    %v146 = vld [vmem:[%s3 + $0x10] sm:$0xff]
    %v147 = vld [vmem:[%s3 + $0x18] sm:$0xff]
    %v148 = vld [vmem:[%s3 + $0x20] sm:$0xff]
    %v149 = vld [vmem:[%s3 + $0x28] sm:$0xff]
    %v150 = vld [vmem:[%s3 + $0x30] sm:$0xff]
    %v151 = vld [vmem:[%s3 + $0x38] sm:$0xff]
    %v152 = vld [vmem:[%s3 + $0x40] sm:$0xff]
    %v153 = vld [vmem:[%s3 + $0x48] sm:$0xff]
    %v154 = vld [vmem:[%s3 + $0x50] sm:$0xff]
    %v155 = vld [vmem:[%s3 + $0x58] sm:$0xff]
    %v156 = vld [vmem:[%s3 + $0x60] sm:$0xff]
    %v157 = vld [vmem:[%s3 + $0x68] sm:$0xff]
    %v158 = vld [vmem:[%s3 + $0x70] sm:$0xff]
    %v159 = vld [vmem:[%s3 + $0x78] sm:$0xff]
    %v160 = vld [vmem:[#allocation5 + $0x1] sm:$0x1]
    %v161 = vlaneseq
    %v162 = vshrl.u32 %v161, 7
    %v163 = vsub.s32 0, %v162
    %v164 = vrot.slane %v160, %v163
    %165 = vmatprep.subr.mxu0 0.0
    %166 = vmatpush1.msra.mxu0 %v144
    %167 = vmatprep.subr.mxu0 0.0
    %168 = vmatpush1.msra.mxu0 %v145
    %169 = vmatprep.subr.mxu0 0.0
    %170 = vmatpush1.msra.mxu0 %v146
    %171 = vmatprep.subr.mxu0 0.0
    %172 = vmatpush1.msra.mxu0 %v147
    %173 = vmatprep.subr.mxu0 0.0
    %174 = vmatpush1.msra.mxu0 %v148
    %175 = vmatprep.subr.mxu0 0.0
    %176 = vmatpush1.msra.mxu0 %v149
    %177 = vmatprep.subr.mxu0 0.0
    %178 = vmatpush1.msra.mxu0 %v150
    %179 = vmatprep.subr.mxu0 0.0
    %180 = vmatpush1.msra.mxu0 %v151
    %181 = vmatprep.subr.mxu0 0.0
    %182 = vmatpush1.msra.mxu0 %v152
    %183 = vmatprep.subr.mxu0 0.0
    %184 = vmatpush1.msra.mxu0 %v153
    %185 = vmatprep.subr.mxu0 0.0
    %186 = vmatpush1.msra.mxu0 %v154
    %187 = vmatprep.subr.mxu0 0.0
    %188 = vmatpush1.msra.mxu0 %v155
    %189 = vmatprep.subr.mxu0 0.0
    %190 = vmatpush1.msra.mxu0 %v156
    %191 = vmatprep.subr.mxu0 0.0
    %192 = vmatpush1.msra.mxu0 %v157
    %193 = vmatprep.subr.mxu0 0.0
    %194 = vmatpush1.msra.mxu0 %v158
    %195 = vmatprep.subr.mxu0 0.0
    %196 = vmatpush1.msra.mxu0 %v159
    %197 = vmatprep.subr.mxu0 0.0
    %198 = vmatpush1.msra.mxu0 0.0
    %199 = vmatprep.subr.mxu0 0.0
    %200 = vmatpush1.msra.mxu0 0.0
    %201 = vmatprep.subr.mxu0 0.0
    %202 = vmatpush1.msra.mxu0 0.0
    %203 = vmatprep.subr.mxu0 0.0
    %204 = vmatpush1.msra.mxu0 0.0
    %205 = vmatprep.subr.mxu0 0.0
    %206 = vmatpush1.msra.mxu0 0.0
    %207 = vmatprep.subr.mxu0 0.0
    %208 = vmatpush1.msra.mxu0 0.0
    %209 = vmatprep.subr.mxu0 0.0
    %210 = vmatpush1.msra.mxu0 0.0
    %211 = vmatprep.subr.mxu0 0.0
    %212 = vmatpush1.msra.mxu0 0.0
    %213 = vmatprep.subr.mxu0 0.0
    %214 = vmatpush1.msra.mxu0 0.0
    %215 = vmatprep.subr.mxu0 0.0
    %216 = vmatpush1.msra.mxu0 0.0
    %217 = vmatprep.subr.mxu0 0.0
    %218 = vmatpush1.msra.mxu0 0.0
    %219 = vmatprep.subr.mxu0 0.0
    %220 = vmatpush1.msra.mxu0 0.0
    %221 = vmatprep.subr.mxu0 0.0
    %222 = vmatpush1.msra.mxu0 0.0
    %223 = vmatprep.subr.mxu0 0.0
    %224 = vmatpush1.msra.mxu0 0.0
    %225 = vmatprep.subr.mxu0 0.0
    %226 = vmatpush1.msra.mxu0 0.0
    %227 = vmatprep.subr.mxu0 0.0
    %228 = vmatpush1.msra.mxu0 0.0
    %229 = vmatprep.mubr.f32.mxu0 0.0
    %230 = vmatmul.mubr.f32.gmra.mrb[0].mxu0 %v143
    %v231 = vpop.f32.mrb[0].mxu0
    %v232 = vadd.f32 %v164, %v231
    %v233 = vpop.f32.mrb[0].mxu0
    %234 = vdwg.mxu0
    %v235 = vld [vmem:[#allocation7] sm:$0xff]
    %v236 = vld [vmem:[#allocation7 + $0x8] sm:$0xff]
    %v237 = vld [vmem:[#allocation7 + $0x10] sm:$0xff]
    %v238 = vld [vmem:[#allocation7 + $0x18] sm:$0xff]
    %v239 = vld [vmem:[#allocation7 + $0x20] sm:$0xff]
    %v240 = vld [vmem:[#allocation7 + $0x28] sm:$0xff]
    %v241 = vld [vmem:[#allocation7 + $0x30] sm:$0xff]
    %v242 = vld [vmem:[#allocation7 + $0x38] sm:$0xff]
    %v243 = vld [vmem:[#allocation7 + $0x40] sm:$0xff]
    %v244 = vld [vmem:[#allocation7 + $0x48] sm:$0xff]
    %v245 = vld [vmem:[#allocation7 + $0x50] sm:$0xff]
    %v246 = vld [vmem:[#allocation7 + $0x58] sm:$0xff]
    %v247 = vld [vmem:[#allocation7 + $0x60] sm:$0xff]
    %v248 = vld [vmem:[#allocation7 + $0x68] sm:$0xff]
    %v249 = vld [vmem:[#allocation7 + $0x70] sm:$0xff]
    %v250 = vld [vmem:[#allocation7 + $0x78] sm:$0xff]
    %v251 = vld [vmem:[#allocation5 + $0x2] sm:$0x1]
    %v252 = vlaneseq
    %v253 = vshrl.u32 %v252, 7
    %v254 = vsub.s32 0, %v253
    %v255 = vrot.slane %v251, %v254
    %256 = vmatprep.subr.mxu0 0.0
    %257 = vmatpush1.msra.mxu0 %v235
    %258 = vmatprep.subr.mxu0 0.0
    %259 = vmatpush1.msra.mxu0 %v236
    %260 = vmatprep.subr.mxu0 0.0
    %261 = vmatpush1.msra.mxu0 %v237
    %262 = vmatprep.subr.mxu0 0.0
    %263 = vmatpush1.msra.mxu0 %v238
    %264 = vmatprep.subr.mxu0 0.0
    %265 = vmatpush1.msra.mxu0 %v239
    %266 = vmatprep.subr.mxu0 0.0
    %267 = vmatpush1.msra.mxu0 %v240
    %268 = vmatprep.subr.mxu0 0.0
    %269 = vmatpush1.msra.mxu0 %v241
    %270 = vmatprep.subr.mxu0 0.0
    %271 = vmatpush1.msra.mxu0 %v242
    %272 = vmatprep.subr.mxu0 0.0
    %273 = vmatpush1.msra.mxu0 %v243
    %274 = vmatprep.subr.mxu0 0.0
    %275 = vmatpush1.msra.mxu0 %v244
    %276 = vmatprep.subr.mxu0 0.0
    %277 = vmatpush1.msra.mxu0 %v245
    %278 = vmatprep.subr.mxu0 0.0
    %279 = vmatpush1.msra.mxu0 %v246
    %280 = vmatprep.subr.mxu0 0.0
    %281 = vmatpush1.msra.mxu0 %v247
    %282 = vmatprep.subr.mxu0 0.0
    %283 = vmatpush1.msra.mxu0 %v248
    %284 = vmatprep.subr.mxu0 0.0
    %285 = vmatpush1.msra.mxu0 %v249
    %286 = vmatprep.subr.mxu0 0.0
    %287 = vmatpush1.msra.mxu0 %v250
    %288 = vmatprep.subr.mxu0 0.0
    %289 = vmatpush1.msra.mxu0 0.0
    %290 = vmatprep.subr.mxu0 0.0
    %291 = vmatpush1.msra.mxu0 0.0
    %292 = vmatprep.subr.mxu0 0.0
    %293 = vmatpush1.msra.mxu0 0.0
    %294 = vmatprep.subr.mxu0 0.0
    %295 = vmatpush1.msra.mxu0 0.0
    %296 = vmatprep.subr.mxu0 0.0
    %297 = vmatpush1.msra.mxu0 0.0
    %298 = vmatprep.subr.mxu0 0.0
    %299 = vmatpush1.msra.mxu0 0.0
    %300 = vmatprep.subr.mxu0 0.0
    %301 = vmatpush1.msra.mxu0 0.0
    %302 = vmatprep.subr.mxu0 0.0
    %303 = vmatpush1.msra.mxu0 0.0
    %304 = vmatprep.subr.mxu0 0.0
    %305 = vmatpush1.msra.mxu0 0.0
    %306 = vmatprep.subr.mxu0 0.0
    %307 = vmatpush1.msra.mxu0 0.0
    %308 = vmatprep.subr.mxu0 0.0
    %309 = vmatpush1.msra.mxu0 0.0
    %310 = vmatprep.subr.mxu0 0.0
    %311 = vmatpush1.msra.mxu0 0.0
    %312 = vmatprep.subr.mxu0 0.0
    %313 = vmatpush1.msra.mxu0 0.0
    %314 = vmatprep.subr.mxu0 0.0
    %315 = vmatpush1.msra.mxu0 0.0
    %316 = vmatprep.subr.mxu0 0.0
    %317 = vmatpush1.msra.mxu0 0.0
    %318 = vmatprep.subr.mxu0 0.0
    %319 = vmatpush1.msra.mxu0 0.0
    %320 = vmatprep.mubr.f32.mxu0 0.0
    %321 = vmatmul.mubr.f32.gmra.mrb[0].mxu0 %v232
    %v322 = vpop.f32.mrb[0].mxu0
    %v323 = vadd.f32 %v255, %v322
    %v324 = vpop.f32.mrb[0].mxu0
    %325 = vdwg.mxu0
    %v326 = vtanh.pop %v323
    %v327 = vld [vmem:[%s5] sm:$0xff]
    %v328 = vld [vmem:[%s5 + $0x8] sm:$0xff]
    %v329 = vld [vmem:[%s5 + $0x10] sm:$0xff]
    %v330 = vld [vmem:[%s5 + $0x18] sm:$0xff]
    %v331 = vld [vmem:[%s5 + $0x20] sm:$0xff]
    %v332 = vld [vmem:[%s5 + $0x28] sm:$0xff]
    %v333 = vld [vmem:[%s5 + $0x30] sm:$0xff]
    %v334 = vld [vmem:[%s5 + $0x38] sm:$0xff]
    %v335 = vld [vmem:[%s5 + $0x40] sm:$0xff]
    %v336 = vld [vmem:[%s5 + $0x48] sm:$0xff]
    %v337 = vld [vmem:[%s5 + $0x50] sm:$0xff]
    %v338 = vld [vmem:[%s5 + $0x58] sm:$0xff]
    %v339 = vld [vmem:[%s5 + $0x60] sm:$0xff]
    %v340 = vld [vmem:[%s5 + $0x68] sm:$0xff]
    %v341 = vld [vmem:[%s5 + $0x70] sm:$0xff]
    %v342 = vld [vmem:[%s5 + $0x78] sm:$0xff]
    %v343 = vld [vmem:[#allocation5 + $0x3] sm:$0x1]
    %v344 = vlaneseq
    %v345 = vshrl.u32 %v344, 7
    %v346 = vsub.s32 0, %v345
    %v347 = vrot.slane %v343, %v346
    %348 = vmatprep.subr.mxu0 0.0
    %349 = vmatpush1.msra.mxu0 %v327
    %350 = vmatprep.subr.mxu0 0.0
    %351 = vmatpush1.msra.mxu0 %v328
    %352 = vmatprep.subr.mxu0 0.0
    %353 = vmatpush1.msra.mxu0 %v329
    %354 = vmatprep.subr.mxu0 0.0
    %355 = vmatpush1.msra.mxu0 %v330
    %356 = vmatprep.subr.mxu0 0.0
    %357 = vmatpush1.msra.mxu0 %v331
    %358 = vmatprep.subr.mxu0 0.0
    %359 = vmatpush1.msra.mxu0 %v332
    %360 = vmatprep.subr.mxu0 0.0
    %361 = vmatpush1.msra.mxu0 %v333
    %362 = vmatprep.subr.mxu0 0.0
    %363 = vmatpush1.msra.mxu0 %v334
    %364 = vmatprep.subr.mxu0 0.0
    %365 = vmatpush1.msra.mxu0 %v335
    %366 = vmatprep.subr.mxu0 0.0
    %367 = vmatpush1.msra.mxu0 %v336
    %368 = vmatprep.subr.mxu0 0.0
    %369 = vmatpush1.msra.mxu0 %v337
    %370 = vmatprep.subr.mxu0 0.0
    %371 = vmatpush1.msra.mxu0 %v338
    %372 = vmatprep.subr.mxu0 0.0
    %373 = vmatpush1.msra.mxu0 %v339
    %374 = vmatprep.subr.mxu0 0.0
    %375 = vmatpush1.msra.mxu0 %v340
    %376 = vmatprep.subr.mxu0 0.0
    %377 = vmatpush1.msra.mxu0 %v341
    %378 = vmatprep.subr.mxu0 0.0
    %379 = vmatpush1.msra.mxu0 %v342
    %380 = vmatprep.subr.mxu0 0.0
    %381 = vmatpush1.msra.mxu0 0.0
    %382 = vmatprep.subr.mxu0 0.0
    %383 = vmatpush1.msra.mxu0 0.0
    %384 = vmatprep.subr.mxu0 0.0
    %385 = vmatpush1.msra.mxu0 0.0
    %386 = vmatprep.subr.mxu0 0.0
    %387 = vmatpush1.msra.mxu0 0.0
    %388 = vmatprep.subr.mxu0 0.0
    %389 = vmatpush1.msra.mxu0 0.0
    %390 = vmatprep.subr.mxu0 0.0
    %391 = vmatpush1.msra.mxu0 0.0
    %392 = vmatprep.subr.mxu0 0.0
    %393 = vmatpush1.msra.mxu0 0.0
    %394 = vmatprep.subr.mxu0 0.0
    %395 = vmatpush1.msra.mxu0 0.0
    %396 = vmatprep.subr.mxu0 0.0
    %397 = vmatpush1.msra.mxu0 0.0
    %398 = vmatprep.subr.mxu0 0.0
    %399 = vmatpush1.msra.mxu0 0.0
    %400 = vmatprep.subr.mxu0 0.0
    %401 = vmatpush1.msra.mxu0 0.0
    %402 = vmatprep.subr.mxu0 0.0
    %403 = vmatpush1.msra.mxu0 0.0
    %404 = vmatprep.subr.mxu0 0.0
    %405 = vmatpush1.msra.mxu0 0.0
    %406 = vmatprep.subr.mxu0 0.0
    %407 = vmatpush1.msra.mxu0 0.0
    %408 = vmatprep.subr.mxu0 0.0
    %409 = vmatpush1.msra.mxu0 0.0
    %410 = vmatprep.subr.mxu0 0.0
    %411 = vmatpush1.msra.mxu0 0.0
    %412 = vmatprep.mubr.f32.mxu0 0.0
    %413 = vmatmul.mubr.f32.gmra.mrb[0].mxu0 %v326
    %v414 = vpop.f32.mrb[0].mxu0
    %v415 = vadd.f32 %v347, %v414
    %v416 = vpop.f32.mrb[0].mxu0
    %417 = vdwg.mxu0
    %418 = vst.msk [vmem:[#allocation8] sm:$0xff] %vm69, %v415
    // Predicated region
    $region38: #{tpu_custom_call.1} parent=1 // pred_check
      _
    $region39: #{tpu_custom_call.1} parent=1 // pred_check_branch
      %420 = sbr.rel (0) target = $region41
    $region40: #{tpu_custom_call.1} parent=1 // pred_region
      %s422 = ssub.s32 128, 128
      %423 = vsyncadd [#allocation4], %s422
      %s425 = sshll.u32 [#allocation8], 4
      %s426 = int_to_ptr.vmem [resolvable:$true] %s425
      %428 = dma.vmem_to_hbm [thread:$0]  %s426, 128, %s6, [#allocation4]
    $region41: #{tpu_custom_call.1} parent=1 // pred_fallthru
      _
    // Predicated region
    $region42: #{tpu_custom_call.1} parent=1 // pred_check
      _
    $region43: #{tpu_custom_call.1} parent=1 // pred_check_branch
      %430 = sbr.rel (0) target = $region45
    $region44: #{tpu_custom_call.1} parent=1 // pred_region
      %431 = dma.done [#allocation4], 128
    $region45: #{tpu_custom_call.1} parent=1 // pred_fallthru
      _
    %432 = vsyncpa [#allocation3], 1
    %433 = vsyncpa [#allocation6], 1
    %434 = vsyncpa [#allocation4], 1

</llo_original>
